<compile_context>
chip_gen: v5e
topology: v5e:2x2
jax: 0.10.0
libtpu: 0.0.40
codegen_flags: <defaults>
</compile_context>

<pallas_src>
import jax
import jax.numpy as jnp
from jax.experimental import pallas as pl
from jax.experimental.pallas import tpu as pltpu

LANE = 128          # vreg lane width
SUBLANE_BF16 = 16   # bf16 sublane packing (2 rows per 32-bit sublane)
_SPLIT_THRESHOLD = 256  # rows above which we split into >=2 tiles (v7x 2-TC)


def _round_up(x, m):
    return ((x + m - 1) // m) * m


# --------------------------------------------------------------------------
# Kernel: one batch tile of the 3-layer MLP, weights resident in VMEM.
# --------------------------------------------------------------------------
def _value_net_kernel(s_ref, a_ref, w1s_ref, w1a_ref, b1_ref,
                      w2_ref, b2_ref, w3_ref, b3_ref, out_ref):
    # Layer 1 as split-K: state @ w1[:S,:] + action @ w1[S:,:]  (avoids an
    # HBM-materialized concat in the wrapper).  bf16 MXU inputs, f32 acc.
    h1 = (jnp.dot(s_ref[...], w1s_ref[...], preferred_element_type=jnp.float32)
          + jnp.dot(a_ref[...], w1a_ref[...], preferred_element_type=jnp.float32)
          + b1_ref[...])
    h1 = jnp.maximum(h1, 0.0).astype(w2_ref.dtype)              # ReLU

    h2 = jnp.dot(h1, w2_ref[...], preferred_element_type=jnp.float32) + b2_ref[...]
    h2 = jnp.maximum(h2, 0.0).astype(w3_ref.dtype)              # ReLU

    out = jnp.dot(h2, w3_ref[...], preferred_element_type=jnp.float32) + b3_ref[...]
    out_ref[...] = out.astype(out_ref.dtype)                    # bf16 writeback


# --------------------------------------------------------------------------
# Parameter handling
# --------------------------------------------------------------------------
def init_params(key, num_states, num_actions, hidden_size, init_w=0.003):
    """PyTorch-equivalent parameters at their natural shapes (weights (in,out))."""
    ks = jax.random.split(key, 6)
    in1 = num_states + num_actions

    def uni(k, shape, bound):
        return jax.random.uniform(k, shape, jnp.float32, -bound, bound)

    # nn.Linear default init: U(-1/sqrt(fan_in), 1/sqrt(fan_in))
    bnd1 = 1.0 / float(in1) ** 0.5
    w1 = uni(ks[0], (in1, hidden_size), bnd1)
    b1 = uni(ks[1], (hidden_size,), bnd1)

    bnd2 = 1.0 / float(hidden_size) ** 0.5
    w2 = uni(ks[2], (hidden_size, hidden_size), bnd2)
    b2 = uni(ks[3], (hidden_size,), bnd2)

    # linear3: explicit U(-init_w, init_w)
    w3 = uni(ks[4], (hidden_size, num_actions), init_w)
    b3 = uni(ks[5], (hidden_size,) if False else (num_actions,), init_w)
    return (w1, b1, w2, b2, w3, b3)


def pack_params(params, num_states, compute_dtype=jnp.bfloat16):
    """Pad feature dims to lane width (128), split w1 by state/action rows,
    cast weights to the MXU dtype.

    Zero padding keeps the math exact: padded hidden columns get bias 0 so
    ReLU(0)=0, and padded weight rows/cols contribute nothing downstream.
    """
    w1, b1, w2, b2, w3, b3 = params
    hidden = w1.shape[1]
    num_actions = w3.shape[1]
    hp = _round_up(hidden, LANE)
    ap = _round_up(num_actions, LANE)

    def pad2(a, shape):
        buf = jnp.zeros(shape, jnp.float32)
        return buf.at[: a.shape[0], : a.shape[1]].set(a)

    w1s = pad2(w1[:num_states, :], (num_states, hp)).astype(compute_dtype)
    w1a = pad2(w1[num_states:, :], (w1.shape[0] - num_states, hp)).astype(compute_dtype)
    w2p = pad2(w2, (hp, hp)).astype(compute_dtype)
    w3p = pad2(w3, (hp, ap)).astype(compute_dtype)
    b1p = pad2(b1.reshape(1, -1), (1, hp))           # biases stay f32
    b2p = pad2(b2.reshape(1, -1), (1, hp))
    b3p = pad2(b3.reshape(1, -1), (1, ap))
    return (w1s, w1a, b1p, w2p, b2p, w3p, b3p)


# --------------------------------------------------------------------------
# Tile selection: large tiles (amortize ~0.35 us/step overhead), even tile
# count for big batches (balanced v7x 2-TC sharding), sublane-aligned.
# --------------------------------------------------------------------------
def _choose_batch_tile(batch, block_b):
    b_aligned = _round_up(batch, SUBLANE_BF16)
    if b_aligned <= block_b:
        if b_aligned >= _SPLIT_THRESHOLD:
            # big enough that splitting into 2 tiles is worth it on v7x
            tb = _round_up((b_aligned + 1) // 2, SUBLANE_BF16)
        else:
            tb = b_aligned                      # tiny batch: single tile
    else:
        n_tiles = -(-b_aligned // block_b)      # ceil
        if n_tiles % 2:
            n_tiles += 1                        # even count -> balanced 2-TC split
        tb = _round_up(-(-b_aligned // n_tiles), SUBLANE_BF16)
    b_pad = _round_up(b_aligned, tb)
    return tb, b_pad


# --------------------------------------------------------------------------
# Wrapper
# --------------------------------------------------------------------------
def value_network_forward(state, action, packed_params, num_actions, *,
                          block_b=1024):
    """Pallas forward.  state: (B, S), action: (B, A) -> (B, num_actions) f32."""
    w1s, w1a, b1p, w2p, b2p, w3p, b3p = packed_params
    batch = state.shape[0]
    k_s = w1s.shape[0]
    k_a = w1a.shape[0]
    hp = w2p.shape[0]
    ap = w3p.shape[1]
    assert state.shape[1] == k_s and action.shape[1] == k_a

    # Cast to bf16 in the wrapper (halves input DMA; matmul inputs are bf16
    # anyway) and pad the batch up to a tile multiple.
    tb, b_pad = _choose_batch_tile(batch, block_b)
    s = state.astype(jnp.bfloat16)
    a = action.astype(jnp.bfloat16)
    if b_pad != batch:
        s = jnp.pad(s, ((0, b_pad - batch), (0, 0)))
        a = jnp.pad(a, ((0, b_pad - batch), (0, 0)))

    grid = (pl.cdiv(b_pad, tb),)

    def resident(arr):  # weights/biases: same block every step -> stay in VMEM
        return pl.BlockSpec(arr.shape, lambda i: (0, 0))

    # Advisory cost estimate so XLA can schedule/overlap around the call.
    flops = 2 * b_pad * (k_s * hp + k_a * hp + hp * hp + hp * ap)
    bytes_accessed = (
        b_pad * (k_s + k_a) * 2            # bf16 inputs
        + b_pad * ap * 2                   # bf16 output
        + (w1s.size + w1a.size + w2p.size + w3p.size) * 2
        + (b1p.size + b2p.size + b3p.size) * 4
    )
    cost = pl.CostEstimate(flops=flops, transcendentals=0,
                           bytes_accessed=bytes_accessed)

    out = pl.pallas_call(
        _value_net_kernel,
        out_shape=jax.ShapeDtypeStruct((b_pad, ap), jnp.bfloat16),
        grid=grid,
        in_specs=[
            pl.BlockSpec((tb, k_s), lambda i: (i, 0)),   # batch-tiled state
            pl.BlockSpec((tb, k_a), lambda i: (i, 0)),   # batch-tiled action
            resident(w1s), resident(w1a), resident(b1p),
            resident(w2p), resident(b2p),
            resident(w3p), resident(b3p),
        ],
        out_specs=pl.BlockSpec((tb, ap), lambda i: (i, 0)),
        compiler_params=pltpu.CompilerParams(
            dimension_semantics=("parallel",)),
        cost_estimate=cost,
    )(s, a, w1s, w1a, b1p, w2p, b2p, w3p, b3p)

    return out[:batch, :num_actions].astype(jnp.float32)


# --------------------------------------------------------------------------
# Pure-JAX reference (f32, natural shapes)
# --------------------------------------------------------------------------
def _reference_forward(state, action, params):
    w1, b1, w2, b2, w3, b3 = params
    x = jnp.concatenate([state, action], axis=1)
    h1 = jnp.maximum(x @ w1 + b1, 0.0)
    h2 = jnp.maximum(h1 @ w2 + b2, 0.0)
    return h2 @ w3 + b3


if __name__ == "__main__":
    num_states = 12
    num_actions = 4
    hidden_size = 32

    key = jax.random.PRNGKey(0)
    k_s, k_a, k_p, k_s2, k_a2 = jax.random.split(key, 5)

    params = init_params(k_p, num_states, num_actions, hidden_size)
    packed = pack_params(params, num_states)     # lane-padded, bf16, split w1

    # --- small case (single tile) ---
    batch = 8
    state = jax.random.normal(k_s, (batch, num_states), jnp.float32)
    action = jax.random.normal(k_a, (batch, num_actions), jnp.float32)

    out = value_network_forward(state, action, packed, num_actions)
    out = jax.block_until_ready(out)
    ref = _reference_forward(state, action, params)
    assert out.shape == (batch, num_actions)
    # bf16 matmul inputs/output with f32 accumulation -> loosened tolerance.
    assert jnp.allclose(out, ref, atol=1e-2, rtol=1e-2)

    # --- multi-tile case (exercises batch grid + padding + even-split path) ---
    batch2 = 300
    state2 = jax.random.normal(k_s2, (batch2, num_states), jnp.float32)
    action2 = jax.random.normal(k_a2, (batch2, num_actions), jnp.float32)

    out2 = value_network_forward(state2, action2, packed, num_actions)
    out2 = jax.block_until_ready(out2)
    ref2 = _reference_forward(state2, action2, params)
    assert out2.shape == (batch2, num_actions)
    assert jnp.allclose(out2, ref2, atol=1e-2, rtol=1e-2)

    print("KERNEL_OK")
</pallas_src>

<mosaic_0001>
module attributes {stable_mosaic.version = 11 : i64} {
  func.func @_value_net_kernel(%arg0: i32, %arg1: memref<16x12xbf16, #tpu.memory_space<vmem>>, %arg2: memref<16x4xbf16, #tpu.memory_space<vmem>>, %arg3: memref<12x128xbf16, #tpu.memory_space<vmem>>, %arg4: memref<4x128xbf16, #tpu.memory_space<vmem>>, %arg5: memref<1x128xf32, #tpu.memory_space<vmem>>, %arg6: memref<128x128xbf16, #tpu.memory_space<vmem>>, %arg7: memref<1x128xf32, #tpu.memory_space<vmem>>, %arg8: memref<128x128xbf16, #tpu.memory_space<vmem>>, %arg9: memref<1x128xf32, #tpu.memory_space<vmem>>, %arg10: memref<16x128xbf16, #tpu.memory_space<vmem>>) attributes {dimension_semantics = [#tpu.dimension_semantics<parallel>], iteration_bounds = array<i64: 1>, scalar_prefetch = 0 : i64, scratch_operands = 0 : i64, tpu.core_type = #tpu.core_type<tc>, window_params = [{transform_indices = @transform_0, window_bounds = array<i64: 16, 12>}, {transform_indices = @transform_1, window_bounds = array<i64: 16, 4>}, {pipeline_mode = #tpu.pipeline_mode<synchronous>, transform_indices = @transform_2, window_bounds = array<i64: 12, 128>}, {pipeline_mode = #tpu.pipeline_mode<synchronous>, transform_indices = @transform_3, window_bounds = array<i64: 4, 128>}, {pipeline_mode = #tpu.pipeline_mode<synchronous>, transform_indices = @transform_4, window_bounds = array<i64: 1, 128>}, {pipeline_mode = #tpu.pipeline_mode<synchronous>, transform_indices = @transform_5, window_bounds = array<i64: 128, 128>}, {pipeline_mode = #tpu.pipeline_mode<synchronous>, transform_indices = @transform_6, window_bounds = array<i64: 1, 128>}, {pipeline_mode = #tpu.pipeline_mode<synchronous>, transform_indices = @transform_7, window_bounds = array<i64: 128, 128>}, {pipeline_mode = #tpu.pipeline_mode<synchronous>, transform_indices = @transform_8, window_bounds = array<i64: 1, 128>}, {transform_indices = @transform_9, window_bounds = array<i64: 16, 128>}]} {
    %c0 = arith.constant 0 : index
    %c0_0 = arith.constant 0 : index
    %0 = vector.load %arg1[%c0, %c0_0] : memref<16x12xbf16, #tpu.memory_space<vmem>>, vector<16x12xbf16>
    %c0_1 = arith.constant 0 : index
    %c0_2 = arith.constant 0 : index
    %1 = vector.load %arg3[%c0_1, %c0_2] : memref<12x128xbf16, #tpu.memory_space<vmem>>, vector<12x128xbf16>
    %cst = arith.constant dense<0.000000e+00> : vector<16x128xf32>
    %2 = tpu.matmul %0, %1, %cst {dimension_numbers = #tpu.dot_dimension_numbers<[1], [0], [0], [1], [0, 0, 1, 1], [], []>} : vector<16x12xbf16>, vector<12x128xbf16>, vector<16x128xf32> -> vector<16x128xf32>
    %c0_3 = arith.constant 0 : index
    %c0_4 = arith.constant 0 : index
    %3 = vector.load %arg2[%c0_3, %c0_4] : memref<16x4xbf16, #tpu.memory_space<vmem>>, vector<16x4xbf16>
    %c0_5 = arith.constant 0 : index
    %c0_6 = arith.constant 0 : index
    %4 = vector.load %arg4[%c0_5, %c0_6] : memref<4x128xbf16, #tpu.memory_space<vmem>>, vector<4x128xbf16>
    %cst_7 = arith.constant dense<0.000000e+00> : vector<16x128xf32>
    %5 = tpu.matmul %3, %4, %cst_7 {dimension_numbers = #tpu.dot_dimension_numbers<[1], [0], [0], [1], [0, 0, 1, 1], [], []>} : vector<16x4xbf16>, vector<4x128xbf16>, vector<16x128xf32> -> vector<16x128xf32>
    %6 = arith.addf %2, %5 : vector<16x128xf32>
    %c0_8 = arith.constant 0 : index
    %c0_9 = arith.constant 0 : index
    %7 = vector.load %arg5[%c0_8, %c0_9] : memref<1x128xf32, #tpu.memory_space<vmem>>, vector<1x128xf32>
    %8 = vector.broadcast %7 : vector<1x128xf32> to vector<16x128xf32>
    %9 = arith.addf %6, %8 : vector<16x128xf32>
    %cst_10 = arith.constant 0.000000e+00 : f32
    %10 = vector.broadcast %cst_10 : f32 to vector<16x128xf32>
    %11 = arith.maximumf %9, %10 : vector<16x128xf32>
    %12 = arith.truncf %11 : vector<16x128xf32> to vector<16x128xbf16>
    %c0_11 = arith.constant 0 : index
    %c0_12 = arith.constant 0 : index
    %13 = vector.load %arg6[%c0_11, %c0_12] : memref<128x128xbf16, #tpu.memory_space<vmem>>, vector<128x128xbf16>
    %cst_13 = arith.constant dense<0.000000e+00> : vector<16x128xf32>
    %14 = tpu.matmul %12, %13, %cst_13 {dimension_numbers = #tpu.dot_dimension_numbers<[1], [0], [0], [1], [0, 0, 1, 1], [], []>} : vector<16x128xbf16>, vector<128x128xbf16>, vector<16x128xf32> -> vector<16x128xf32>
    %c0_14 = arith.constant 0 : index
    %c0_15 = arith.constant 0 : index
    %15 = vector.load %arg7[%c0_14, %c0_15] : memref<1x128xf32, #tpu.memory_space<vmem>>, vector<1x128xf32>
    %16 = vector.broadcast %15 : vector<1x128xf32> to vector<16x128xf32>
    %17 = arith.addf %14, %16 : vector<16x128xf32>
    %cst_16 = arith.constant 0.000000e+00 : f32
    %18 = vector.broadcast %cst_16 : f32 to vector<16x128xf32>
    %19 = arith.maximumf %17, %18 : vector<16x128xf32>
    %20 = arith.truncf %19 : vector<16x128xf32> to vector<16x128xbf16>
    %c0_17 = arith.constant 0 : index
    %c0_18 = arith.constant 0 : index
    %21 = vector.load %arg8[%c0_17, %c0_18] : memref<128x128xbf16, #tpu.memory_space<vmem>>, vector<128x128xbf16>
    %cst_19 = arith.constant dense<0.000000e+00> : vector<16x128xf32>
    %22 = tpu.matmul %20, %21, %cst_19 {dimension_numbers = #tpu.dot_dimension_numbers<[1], [0], [0], [1], [0, 0, 1, 1], [], []>} : vector<16x128xbf16>, vector<128x128xbf16>, vector<16x128xf32> -> vector<16x128xf32>
    %c0_20 = arith.constant 0 : index
    %c0_21 = arith.constant 0 : index
    %23 = vector.load %arg9[%c0_20, %c0_21] : memref<1x128xf32, #tpu.memory_space<vmem>>, vector<1x128xf32>
    %24 = vector.broadcast %23 : vector<1x128xf32> to vector<16x128xf32>
    %25 = arith.addf %22, %24 : vector<16x128xf32>
    %26 = arith.truncf %25 : vector<16x128xf32> to vector<16x128xbf16>
    %c0_22 = arith.constant 0 : index
    %c0_23 = arith.constant 0 : index
    %27 = vector.load %arg10[%c0_22, %c0_23] : memref<16x128xbf16, #tpu.memory_space<vmem>>, vector<16x128xbf16>
    tpu.vector_store %arg10[%c0_22, %c0_23], %26 {strides = array<i32>} : memref<16x128xbf16, #tpu.memory_space<vmem>>, vector<16x128xbf16>,
    return
  }
  func.func @transform_0(%arg0: i32) -> (i32, i32) {
    %c0_i32 = arith.constant 0 : i32
    %c0_i32_0 = arith.constant 0 : i32
    return %arg0, %c0_i32 : i32, i32
  }
  func.func @transform_1(%arg0: i32) -> (i32, i32) {
    %c0_i32 = arith.constant 0 : i32
    %c0_i32_0 = arith.constant 0 : i32
    return %arg0, %c0_i32 : i32, i32
  }
  func.func @transform_2(%arg0: i32) -> (i32, i32) {
    %c0_i32 = arith.constant 0 : i32
    %c0_i32_0 = arith.constant 0 : i32
    %c0_i32_1 = arith.constant 0 : i32
    return %c0_i32, %c0_i32_0 : i32, i32
  }
  func.func @transform_3(%arg0: i32) -> (i32, i32) {
    %c0_i32 = arith.constant 0 : i32
    %c0_i32_0 = arith.constant 0 : i32
    %c0_i32_1 = arith.constant 0 : i32
    return %c0_i32, %c0_i32_0 : i32, i32
  }
  func.func @transform_4(%arg0: i32) -> (i32, i32) {
    %c0_i32 = arith.constant 0 : i32
    %c0_i32_0 = arith.constant 0 : i32
    %c0_i32_1 = arith.constant 0 : i32
    return %c0_i32, %c0_i32_0 : i32, i32
  }
  func.func @transform_5(%arg0: i32) -> (i32, i32) {
    %c0_i32 = arith.constant 0 : i32
    %c0_i32_0 = arith.constant 0 : i32
    %c0_i32_1 = arith.constant 0 : i32
    return %c0_i32, %c0_i32_0 : i32, i32
  }
  func.func @transform_6(%arg0: i32) -> (i32, i32) {
    %c0_i32 = arith.constant 0 : i32
    %c0_i32_0 = arith.constant 0 : i32
    %c0_i32_1 = arith.constant 0 : i32
    return %c0_i32, %c0_i32_0 : i32, i32
  }
  func.func @transform_7(%arg0: i32) -> (i32, i32) {
    %c0_i32 = arith.constant 0 : i32
    %c0_i32_0 = arith.constant 0 : i32
    %c0_i32_1 = arith.constant 0 : i32
    return %c0_i32, %c0_i32_0 : i32, i32
  }
  func.func @transform_8(%arg0: i32) -> (i32, i32) {
    %c0_i32 = arith.constant 0 : i32
    %c0_i32_0 = arith.constant 0 : i32
    %c0_i32_1 = arith.constant 0 : i32
    return %c0_i32, %c0_i32_0 : i32, i32
  }
  func.func @transform_9(%arg0: i32) -> (i32, i32) {
    %c0_i32 = arith.constant 0 : i32
    %c0_i32_0 = arith.constant 0 : i32
    return %arg0, %c0_i32 : i32, i32
  }
}

</mosaic_0001>

<llo_original>
// kernel: tpu_custom_call.1
$region0: #{tpu_custom_call.1}
  #allocation0 [shape = 'u32[]', space=smem, size = 0x4, offset = 0x4, fixed_abs, tag = 'smem constant byte address 0x4 - core index']
  #allocation1 [shape = 'u32[72,128]{1,0:T(1,128)}', space=vmem, size = 0x9000, scoped, tag = 'internal scratch']
  %s0 = inlined_call_operand.vmem [shape: bf16[16,12], index: 0, kind: input, shape index: {}]
  %s1 = inlined_call_operand.vmem [shape: bf16[16,4], index: 1, kind: input, shape index: {}]
  %s2 = inlined_call_operand.hbm [shape: bf16[12,128], index: 2, kind: input, shape index: {}]
  %s3 = inlined_call_operand.vmem [shape: bf16[4,128], index: 3, kind: input, shape index: {}]
  %s4 = inlined_call_operand.vmem [shape: f32[1,128], index: 4, kind: input, shape index: {}]
  %s5 = inlined_call_operand.hbm [shape: bf16[128,128], index: 5, kind: input, shape index: {}]
  %s6 = inlined_call_operand.vmem [shape: f32[1,128], index: 6, kind: input, shape index: {}]
  %s7 = inlined_call_operand.hbm [shape: bf16[128,128], index: 7, kind: input, shape index: {}]
  %s8 = inlined_call_operand.vmem [shape: f32[1,128], index: 8, kind: input, shape index: {}]
  %s9 = inlined_call_operand.hbm [shape: bf16[16,128], index: 9, kind: output, shape index: {}]
  %s10 = sld [smem:[#allocation0]]
  $region58: #{tpu_custom_call.1} parent=0
    _
  %s12 = ssub.s32 1, %s10
  %s13 = scalar_select 0, %s12, %s10
  $region1: #{tpu_custom_call.1} parent=0
    #allocation2 [shape = 'u8[4096]{0}', space=vmem, size = 0x1000, scoped, tag = 'input window, operand 2, single buffered']
    #allocation3 [shape = 's32[1]{0}', space=sflag, size = 0x4, scoped, tag = 'scoped memory for tpu_custom_call.1']
    #allocation4 [shape = 's32[1]{0}', space=sflag, size = 0x4, scoped, tag = 'scoped memory for tpu_custom_call.1']
    #allocation5 [shape = 'u8[32768]{0}', space=vmem, size = 0x8000, scoped, tag = 'input window, operand 5, single buffered']
    #allocation6 [shape = 's32[1]{0}', space=sflag, size = 0x4, scoped, tag = 'scoped memory for tpu_custom_call.1']
    #allocation7 [shape = 'u8[32768]{0}', space=vmem, size = 0x8000, scoped, tag = 'input window, operand 7, single buffered']
    #allocation8 [shape = 'u8[4096]{0}', space=vmem, size = 0x1000, scoped, tag = 'output window, operand 0, single buffered']
    %14 = vsyncpa [#allocation3], 0
    %15 = vsyncpa [#allocation6], 0
    %16 = vsyncpa [#allocation4], 0
    // Predicated region
    $region2: #{tpu_custom_call.1} parent=1 // pred_check
      _
    $region3: #{tpu_custom_call.1} parent=1 // pred_check_branch
      %18 = sbr.rel (0) target = $region5
    $region4: #{tpu_custom_call.1} parent=1 // pred_region
      _
    $region5: #{tpu_custom_call.1} parent=1 // pred_fallthru
      _
    // Predicated region
    $region6: #{tpu_custom_call.1} parent=1 // pred_check
      _
    $region7: #{tpu_custom_call.1} parent=1 // pred_check_branch
      %20 = sbr.rel (0) target = $region9
    $region8: #{tpu_custom_call.1} parent=1 // pred_region
      _
    $region9: #{tpu_custom_call.1} parent=1 // pred_fallthru
      _
    // Predicated region
    $region10: #{tpu_custom_call.1} parent=1 // pred_check
      _
    $region11: #{tpu_custom_call.1} parent=1 // pred_check_branch
      %22 = sbr.rel (0) target = $region13
    $region12: #{tpu_custom_call.1} parent=1 // pred_region
      %24 = vsyncadd [#allocation3], 0
      %s25 = sshll.u32 %s2, 4
      %s26 = int_to_ptr.hbm [resolvable:$true] %s25
      %s27 = sshll.u32 [#allocation2], 4
      %s28 = int_to_ptr.vmem [resolvable:$true] %s27
      %33 = dma.hbm_to_vmem [thread:$0]  %s26, 128, %s28, [#allocation3], 64, 64, 4
    $region13: #{tpu_custom_call.1} parent=1 // pred_fallthru
      _
    // Predicated region
    $region14: #{tpu_custom_call.1} parent=1 // pred_check
      _
    $region15: #{tpu_custom_call.1} parent=1 // pred_check_branch
      %35 = sbr.rel (0) target = $region17
    $region16: #{tpu_custom_call.1} parent=1 // pred_region
      _
    $region17: #{tpu_custom_call.1} parent=1 // pred_fallthru
      _
    // Predicated region
    $region18: #{tpu_custom_call.1} parent=1 // pred_check
      _
    $region19: #{tpu_custom_call.1} parent=1 // pred_check_branch
      %37 = sbr.rel (0) target = $region21
    $region20: #{tpu_custom_call.1} parent=1 // pred_region
      _
    $region21: #{tpu_custom_call.1} parent=1 // pred_fallthru
      _
    // Predicated region
    $region22: #{tpu_custom_call.1} parent=1 // pred_check
      _
    $region23: #{tpu_custom_call.1} parent=1 // pred_check_branch
      %39 = sbr.rel (0) target = $region25
    $region24: #{tpu_custom_call.1} parent=1 // pred_region
      %41 = vsyncadd [#allocation6], 0
      %s42 = sshll.u32 %s5, 4
      %s43 = int_to_ptr.hbm [resolvable:$true] %s42
      %s44 = sshll.u32 [#allocation5], 4
      %s45 = int_to_ptr.vmem [resolvable:$true] %s44
      %50 = dma.hbm_to_vmem [thread:$0]  %s43, 1024, %s45, [#allocation6], 64, 64, 4
    $region25: #{tpu_custom_call.1} parent=1 // pred_fallthru
      _
    // Predicated region
    $region26: #{tpu_custom_call.1} parent=1 // pred_check
      _
    $region27: #{tpu_custom_call.1} parent=1 // pred_check_branch
      %52 = sbr.rel (0) target = $region29
    $region28: #{tpu_custom_call.1} parent=1 // pred_region
      _
    $region29: #{tpu_custom_call.1} parent=1 // pred_fallthru
      _
    // Predicated region
    $region30: #{tpu_custom_call.1} parent=1 // pred_check
      _
    $region31: #{tpu_custom_call.1} parent=1 // pred_check_branch
      %54 = sbr.rel (0) target = $region33
    $region32: #{tpu_custom_call.1} parent=1 // pred_region
      %56 = vsyncadd [#allocation6], 0
      %s57 = sshll.u32 %s7, 4
      %s58 = int_to_ptr.hbm [resolvable:$true] %s57
      %s59 = sshll.u32 [#allocation7], 4
      %s60 = int_to_ptr.vmem [resolvable:$true] %s59
      %65 = dma.hbm_to_vmem [thread:$0]  %s58, 1024, %s60, [#allocation6], 64, 64, 4
    $region33: #{tpu_custom_call.1} parent=1 // pred_fallthru
      _
    // Predicated region
    $region34: #{tpu_custom_call.1} parent=1 // pred_check
      _
    $region35: #{tpu_custom_call.1} parent=1 // pred_check_branch
      %67 = sbr.rel (0) target = $region37
    $region36: #{tpu_custom_call.1} parent=1 // pred_region
      _
    $region37: #{tpu_custom_call.1} parent=1 // pred_fallthru
      _
    // Predicated region
    $region38: #{tpu_custom_call.1} parent=1 // pred_check
      _
    $region39: #{tpu_custom_call.1} parent=1 // pred_check_branch
      %69 = sbr.rel (0) target = $region41
    $region40: #{tpu_custom_call.1} parent=1 // pred_region
      %71 = dma.done [#allocation3], 128
    $region41: #{tpu_custom_call.1} parent=1 // pred_fallthru
      _
    // Predicated region
    $region42: #{tpu_custom_call.1} parent=1 // pred_check
      _
    $region43: #{tpu_custom_call.1} parent=1 // pred_check_branch
      %73 = sbr.rel (0) target = $region45
    $region44: #{tpu_custom_call.1} parent=1 // pred_region
      %75 = dma.done [#allocation6], 1024
    $region45: #{tpu_custom_call.1} parent=1 // pred_fallthru
      _
    // Predicated region
    $region46: #{tpu_custom_call.1} parent=1 // pred_check
      _
    $region47: #{tpu_custom_call.1} parent=1 // pred_check_branch
      %77 = sbr.rel (0) target = $region49
    $region48: #{tpu_custom_call.1} parent=1 // pred_region
      %79 = dma.done [#allocation6], 1024
    $region49: #{tpu_custom_call.1} parent=1 // pred_fallthru
      _
    %v81 = vld [vmem:[%s0] sm:$0xf]
    %v82 = vld [vmem:[%s0 + $0x4] sm:$0xf]
    %v83 = vld [vmem:[#allocation2] sm:$0xf]
    %v84 = vld [vmem:[#allocation2 + $0x4] sm:$0x3]
    %v85 = vld [vmem:[%s1] sm:$0xf]
    %v86 = vld [vmem:[%s1 + $0x4] sm:$0xf]
    %v87 = vld [vmem:[%s3] sm:$0x3]
    %v90 = vunpack.c.l.b16 %v85
    %v91 = vunpack.c.l.b16 %v86
    %v92 = vpack.c.b16 %v91, %v90
    %vm93 = vcmask 31744
    %v95 = vsel %vm93, %v92, 0
    %vm97 = vcmask 1041408
    %v99 = vsel %vm97, %v87, 0
    %101 = vmatpush.bf16.msra.mxu0 0
    %102 = vmatpush.bf16.msra.mxu0 0
    %103 = vmatpush.bf16.msra.mxu0 0
    %104 = vmatpush.bf16.msra.mxu0 0
    %105 = vmatpush.bf16.msra.mxu0 0
    %106 = vmatpush.bf16.msra.mxu0 0
    %107 = vmatpush.bf16.msra.mxu0 0
    %108 = vmatpush.bf16.msra.mxu0 %v99
    %109 = vmatmul.bf16.gmra.mxu0 %v95
    %v110 = vpop.f32.mrf.mxu0
    %v111 = vadd.f32 0.0, %v110
    %v112 = vpop.f32.mrf.mxu0
    %v113 = vadd.f32 0.0, %v112
    %114 = vdwg.mxu0
    %v117 = vunpack.c.l.b16 %v81
    %v118 = vunpack.c.l.b16 %v82
    %v119 = vpack.c.b16 %v118, %v117
    %v122 = vunpack.c.l.b16 %v83
    %v123 = vunpack.c.l.b16 %v84
    %v124 = vpack.c.b16 %v123, %v122
    %vm125 = vcmask 97280
    %v127 = vsel %vm125, %v119, 0
    %vm129 = vcmask 1045504
    %v131 = vsel %vm129, %v124, 0
    %133 = vmatpush.bf16.msra.mxu0 0
    %134 = vmatpush.bf16.msra.mxu0 0
    %135 = vmatpush.bf16.msra.mxu0 0
    %136 = vmatpush.bf16.msra.mxu0 0
    %137 = vmatpush.bf16.msra.mxu0 0
    %138 = vmatpush.bf16.msra.mxu0 0
    %139 = vmatpush.bf16.msra.mxu0 0
    %140 = vmatpush.bf16.msra.mxu0 %v131
    %141 = vmatmul.bf16.gmra.mxu0 %v127
    %v142 = vpop.f32.mrf.mxu0
    %v143 = vadd.f32 %v111, %v142
    %v144 = vpop.f32.mrf.mxu0
    %v145 = vadd.f32 %v113, %v144
    %146 = vdwg.mxu0
    %v147 = vld [vmem:[%s4] sm:$0x1]
    %v149 = vperm.slane %v147, 0
    %v151 = vadd.f32 %v143, %v149
    %v152 = vadd.f32 %v145, %v149
    %v153 = vmax.f32 %v151, 0.0
    %v154 = vmax.f32 %v152, 0.0
    %v155 = vpack.c.bf16 %v154, %v153
    %v156 = vld [vmem:[#allocation5] sm:$0xf]
    %v157 = vld [vmem:[#allocation5 + $0x4] sm:$0xf]
    %v158 = vld [vmem:[#allocation5 + $0x8] sm:$0xf]
    %v159 = vld [vmem:[#allocation5 + $0xc] sm:$0xf]
    %v160 = vld [vmem:[#allocation5 + $0x10] sm:$0xf]
    %v161 = vld [vmem:[#allocation5 + $0x14] sm:$0xf]
    %v162 = vld [vmem:[#allocation5 + $0x18] sm:$0xf]
    %v163 = vld [vmem:[#allocation5 + $0x1c] sm:$0xf]
    %v164 = vld [vmem:[#allocation5 + $0x20] sm:$0xf]
    %v165 = vld [vmem:[#allocation5 + $0x24] sm:$0xf]
    %v166 = vld [vmem:[#allocation5 + $0x28] sm:$0xf]
    %v167 = vld [vmem:[#allocation5 + $0x2c] sm:$0xf]
    %v168 = vld [vmem:[#allocation5 + $0x30] sm:$0xf]
    %v169 = vld [vmem:[#allocation5 + $0x34] sm:$0xf]
    %v170 = vld [vmem:[#allocation5 + $0x38] sm:$0xf]
    %v171 = vld [vmem:[#allocation5 + $0x3c] sm:$0xf]
    %v172 = vld [vmem:[%s6] sm:$0x1]
    %v174 = vperm.slane %v172, 0
    %v192 = vunpack.c.l.b16 %v156
    %v193 = vunpack.c.l.b16 %v157
    %v194 = vunpack.c.l.b16 %v158
    %v195 = vunpack.c.l.b16 %v159
    %v196 = vunpack.c.l.b16 %v160
    %v197 = vunpack.c.l.b16 %v161
    %v198 = vunpack.c.l.b16 %v162
    %v199 = vunpack.c.l.b16 %v163
    %v200 = vunpack.c.l.b16 %v164
    %v201 = vunpack.c.l.b16 %v165
    %v202 = vunpack.c.l.b16 %v166
    %v203 = vunpack.c.l.b16 %v167
    %v204 = vunpack.c.l.b16 %v168
    %v205 = vunpack.c.l.b16 %v169
    %v206 = vunpack.c.l.b16 %v170
    %v207 = vunpack.c.l.b16 %v171
    %v208 = vpack.c.b16 %v193, %v192
    %v209 = vpack.c.b16 %v195, %v194
    %v210 = vpack.c.b16 %v197, %v196
    %v211 = vpack.c.b16 %v199, %v198
    %v212 = vpack.c.b16 %v201, %v200
    %v213 = vpack.c.b16 %v203, %v202
    %v214 = vpack.c.b16 %v205, %v204
    %v215 = vpack.c.b16 %v207, %v206
    %224 = vmatpush.bf16.msra.mxu0 %v215
    %225 = vmatpush.bf16.msra.mxu0 %v214
    %226 = vmatpush.bf16.msra.mxu0 %v213
    %227 = vmatpush.bf16.msra.mxu0 %v212
    %228 = vmatpush.bf16.msra.mxu0 %v211
    %229 = vmatpush.bf16.msra.mxu0 %v210
    %230 = vmatpush.bf16.msra.mxu0 %v209
    %231 = vmatpush.bf16.msra.mxu0 %v208
    %232 = vmatmul.bf16.gmra.mxu0 %v155
    %v233 = vpop.f32.mrf.mxu0
    %v234 = vadd.f32 %v174, %v233
    %v235 = vpop.f32.mrf.mxu0
    %v236 = vadd.f32 %v174, %v235
    %237 = vdwg.mxu0
    %v238 = vmax.f32 %v234, 0.0
    %v239 = vmax.f32 %v236, 0.0
    %v240 = vpack.c.bf16 %v239, %v238
    %v241 = vld [vmem:[#allocation7] sm:$0xf]
    %v242 = vld [vmem:[#allocation7 + $0x4] sm:$0xf]
    %v243 = vld [vmem:[#allocation7 + $0x8] sm:$0xf]
    %v244 = vld [vmem:[#allocation7 + $0xc] sm:$0xf]
    %v245 = vld [vmem:[#allocation7 + $0x10] sm:$0xf]
    %v246 = vld [vmem:[#allocation7 + $0x14] sm:$0xf]
    %v247 = vld [vmem:[#allocation7 + $0x18] sm:$0xf]
    %v248 = vld [vmem:[#allocation7 + $0x1c] sm:$0xf]
    %v249 = vld [vmem:[#allocation7 + $0x20] sm:$0xf]
    %v250 = vld [vmem:[#allocation7 + $0x24] sm:$0xf]
    %v251 = vld [vmem:[#allocation7 + $0x28] sm:$0xf]
    %v252 = vld [vmem:[#allocation7 + $0x2c] sm:$0xf]
    %v253 = vld [vmem:[#allocation7 + $0x30] sm:$0xf]
    %v254 = vld [vmem:[#allocation7 + $0x34] sm:$0xf]
    %v255 = vld [vmem:[#allocation7 + $0x38] sm:$0xf]
    %v256 = vld [vmem:[#allocation7 + $0x3c] sm:$0xf]
    %v257 = vld [vmem:[%s8] sm:$0x1]
    %v259 = vperm.slane %v257, 0
    %v277 = vunpack.c.l.b16 %v241
    %v278 = vunpack.c.l.b16 %v242
    %v279 = vunpack.c.l.b16 %v243
    %v280 = vunpack.c.l.b16 %v244
    %v281 = vunpack.c.l.b16 %v245
    %v282 = vunpack.c.l.b16 %v246
    %v283 = vunpack.c.l.b16 %v247
    %v284 = vunpack.c.l.b16 %v248
    %v285 = vunpack.c.l.b16 %v249
    %v286 = vunpack.c.l.b16 %v250
    %v287 = vunpack.c.l.b16 %v251
    %v288 = vunpack.c.l.b16 %v252
    %v289 = vunpack.c.l.b16 %v253
    %v290 = vunpack.c.l.b16 %v254
    %v291 = vunpack.c.l.b16 %v255
    %v292 = vunpack.c.l.b16 %v256
    %v293 = vpack.c.b16 %v278, %v277
    %v294 = vpack.c.b16 %v280, %v279
    %v295 = vpack.c.b16 %v282, %v281
    %v296 = vpack.c.b16 %v284, %v283
    %v297 = vpack.c.b16 %v286, %v285
    %v298 = vpack.c.b16 %v288, %v287
    %v299 = vpack.c.b16 %v290, %v289
    %v300 = vpack.c.b16 %v292, %v291
    %309 = vmatpush.bf16.msra.mxu0 %v300
    %310 = vmatpush.bf16.msra.mxu0 %v299
    %311 = vmatpush.bf16.msra.mxu0 %v298
    %312 = vmatpush.bf16.msra.mxu0 %v297
    %313 = vmatpush.bf16.msra.mxu0 %v296
    %314 = vmatpush.bf16.msra.mxu0 %v295
    %315 = vmatpush.bf16.msra.mxu0 %v294
    %316 = vmatpush.bf16.msra.mxu0 %v293
    %317 = vmatmul.bf16.gmra.mxu0 %v240
    %v318 = vpop.f32.mrf.mxu0
    %v319 = vadd.f32 %v259, %v318
    %v320 = vpop.f32.mrf.mxu0
    %v321 = vadd.f32 %v259, %v320
    %322 = vdwg.mxu0
    %v323 = vpack.c.bf16 %v319, %v319
    %v324 = vpack.c.bf16 %v321, %v321
    %325 = vst [vmem:[#allocation8] sm:$0xf] %v323
    %326 = vst [vmem:[#allocation8 + $0x4] sm:$0xf] %v324
    // Predicated region
    $region50: #{tpu_custom_call.1} parent=1 // pred_check
      _
    $region51: #{tpu_custom_call.1} parent=1 // pred_check_branch
      %328 = sbr.rel (0) target = $region53
    $region52: #{tpu_custom_call.1} parent=1 // pred_region
      %330 = vsyncadd [#allocation4], 0
      %s331 = sshll.u32 [#allocation8], 4
      %s332 = int_to_ptr.vmem [resolvable:$true] %s331
      %s333 = sshll.u32 %s9, 4
      %s334 = int_to_ptr.hbm [resolvable:$true] %s333
      %339 = dma.vmem_to_hbm [thread:$0]  %s332, 128, %s334, [#allocation4], 64, 64, 4
    $region53: #{tpu_custom_call.1} parent=1 // pred_fallthru
      _
    // Predicated region
    $region54: #{tpu_custom_call.1} parent=1 // pred_check
      _
    $region55: #{tpu_custom_call.1} parent=1 // pred_check_branch
      %341 = sbr.rel (0) target = $region57
    $region56: #{tpu_custom_call.1} parent=1 // pred_region
      %343 = dma.done [#allocation4], 128
    $region57: #{tpu_custom_call.1} parent=1 // pred_fallthru
      _
    %344 = vsyncpa [#allocation3], 1
    %345 = vsyncpa [#allocation6], 1
    %346 = vsyncpa [#allocation4], 1

</llo_original>
